<compile_context>
chip_gen: v7x
topology: tpu7x:2x2x1
jax: 0.10.0
libtpu: 0.0.40
codegen_flags: <defaults>
</compile_context>

<pallas_src>
import functools

import jax
import jax.numpy as jnp
from jax.experimental import pallas as pl
from jax.experimental.pallas import tpu as pltpu


def _log_sigmoid(x):
    # numerically stable: logsigmoid(x) = min(x, 0) - log1p(exp(-|x|))
    return jnp.minimum(x, 0.0) - jnp.log1p(jnp.exp(-jnp.abs(x)))


def nsl_kernel(cen_idx_ref, neg_idx_ref, pos_ref,      # per-tile inputs (VMEM)
               cen_tab_ref, ctx_tab_ref,               # VMEM-resident tables
               out_ref,                                # (1, 128) partials
               *, B, K):
    i = pl.program_id(0)

    TBK = cen_idx_ref.shape[0]            # = TB * K (flattened (b, k) rows)
    TB = pos_ref.shape[0]
    Vpad, Dpad = cen_tab_ref.shape

    # ---- fused embedding gather: one-hot(indices) @ resident table (MXU) ---
    # Center indices arrive already repeated K times (one row per (b, k)), so
    # both gathers share the same shape and no 3-D reshape/broadcast is needed.
    vocab_iota = jax.lax.broadcasted_iota(jnp.int32, (TBK, Vpad), 1)
    cen_onehot = (vocab_iota == cen_idx_ref[...]).astype(jnp.float32)  # (TBK, Vpad)
    neg_onehot = (vocab_iota == neg_idx_ref[...]).astype(jnp.float32)  # (TBK, Vpad)
    cen = jnp.dot(cen_onehot, cen_tab_ref[...],
                  preferred_element_type=jnp.float32)                  # (TBK, Dpad)
    neg = jnp.dot(neg_onehot, ctx_tab_ref[...],
                  preferred_element_type=jnp.float32)                  # (TBK, Dpad)

    # ---- negative scores: VPU multiply + XLU lane reduce -------------------
    s = jnp.sum(cen * neg, axis=-1, keepdims=True)                     # (TBK, 1)

    # ---- masked partial sums (rows past the true batch contribute 0) -------
    neg_row = jax.lax.broadcasted_iota(jnp.int32, (TBK, 1), 0) + i * TBK
    neg_part = jnp.sum(jnp.where(neg_row < B * K, _log_sigmoid(-s), 0.0))

    pos_row = jax.lax.broadcasted_iota(jnp.int32, (TB, 1), 0) + i * TB
    pos_part = jnp.sum(jnp.where(pos_row < B, _log_sigmoid(pos_ref[...]), 0.0))

    # ---- lane-dense (1, 128) partial block: lane 0 = pos sum, lane 1 = neg --
    lane = jax.lax.broadcasted_iota(jnp.int32, (1, 128), 1)
    out_ref[...] = jnp.where(lane == 0, pos_part,
                             jnp.where(lane == 1, neg_part, 0.0))


def negative_sampling_loss(pos_scores, center_words, center_emb, context_emb,
                           num_negative, key, *, tile_b=256):
    """Mirrors NegativeSamplingLoss.forward.  The negative-word sampling is
    JAX glue (see TODO below); the gathers, dot products, logsigmoid and
    reductions all run in-kernel."""
    B = center_words.shape[0]
    vocab_size, D = center_emb.shape
    K = num_negative

    # TODO(synk): torch.randint negative sampling replaced by jax.random.randint
    # (uniform over the vocab, no exact RNG-stream equivalence with torch).
    neg_words = jax.random.randint(key, (B, K), 0, vocab_size)

    # Batch tile: multiple of 8 sublanes; pad+mask a partial last tile instead
    # of collapsing to a single untiled step.
    TB = min(tile_b, ((B + 7) // 8) * 8)
    TB = max(8, (TB // 8) * 8)
    B_pad = ((B + TB - 1) // TB) * TB
    num_tiles = B_pad // TB

    # Lane-pad the embedding dim and vocab once in the wrapper (zeros / never-
    # hot one-hot columns are inert in the dot products).
    Dpad = ((D + 127) // 128) * 128
    Vpad = ((vocab_size + 127) // 128) * 128
    cen_tab = jnp.pad(center_emb.astype(jnp.float32),
                      ((0, Vpad - vocab_size), (0, Dpad - D)))
    ctx_tab = jnp.pad(context_emb.astype(jnp.float32),
                      ((0, Vpad - vocab_size), (0, Dpad - D)))

    # Indices / positive scores as column vectors (sublane-tiled, lane dim = 1).
    cen_rep = jnp.repeat(center_words.astype(jnp.int32), K)          # (B*K,)
    pad_bk = (B_pad - B) * K
    cen_idx = jnp.pad(cen_rep, (0, pad_bk)).reshape(B_pad * K, 1)
    neg_idx = jnp.pad(neg_words.reshape(-1).astype(jnp.int32),
                      (0, pad_bk)).reshape(B_pad * K, 1)
    pos_col = jnp.pad(pos_scores.astype(jnp.float32),
                      (0, B_pad - B)).reshape(B_pad, 1)

    kernel = functools.partial(nsl_kernel, B=B, K=K)

    out = pl.pallas_call(
        kernel,
        out_shape=jax.ShapeDtypeStruct((1, 128 * num_tiles), jnp.float32),
        grid_spec=pltpu.PrefetchScalarGridSpec(
            num_scalar_prefetch=0,
            grid=(num_tiles,),
            in_specs=[
                pl.BlockSpec((TB * K, 1), lambda i: (i, 0)),    # repeated center idx
                pl.BlockSpec((TB * K, 1), lambda i: (i, 0)),    # negative idx
                pl.BlockSpec((TB, 1), lambda i: (i, 0)),        # positive scores
                pl.BlockSpec((Vpad, Dpad), lambda i: (0, 0)),   # center table (resident)
                pl.BlockSpec((Vpad, Dpad), lambda i: (0, 0)),   # context table (resident)
            ],
            out_specs=pl.BlockSpec((1, 128), lambda i: (0, i)),
        ),
        compiler_params=pltpu.CompilerParams(
            dimension_semantics=("parallel",),        # 2 TensorCores on v7x
            # Resident tables + per-tile blocks are well under 1 MiB at these
            # vocab sizes; 32 MiB leaves headroom on every generation
            # (v5e default scoped limit is only 16 MiB, v7x physical is 64 MiB).
            vmem_limit_bytes=32 * 1024 * 1024,
        ),
    )(cen_idx, neg_idx, pos_col, cen_tab, ctx_tab)

    parts = out.reshape(num_tiles, 128)
    pos_total = jnp.sum(parts[:, 0])
    neg_total = jnp.sum(parts[:, 1])
    # pos_loss = -mean(logsig(pos)),  neg_loss = -mean(logsig(-neg_scores)),
    # normalized by the TRUE counts (padding never enters the denominator).
    return -(pos_total / B) - (neg_total / (B * K))


def _reference_loss(pos_scores, cen, neg):
    pos_loss = -jnp.mean(_log_sigmoid(pos_scores))
    neg_scores = jnp.sum(cen[:, None, :] * neg, axis=2)
    neg_loss = -jnp.mean(_log_sigmoid(-neg_scores))
    return pos_loss + neg_loss


if __name__ == "__main__":
    key = jax.random.PRNGKey(0)
    k1, k2, k3, k4, k5 = jax.random.split(key, 5)

    vocab_size = 50     # TextPreprocessor max_vocab_size=50
    D = 50              # embedding_dim = 50 (per the spec)
    B = 16              # batch
    K = 5               # num_negative

    # deterministic init, matching nn.init.uniform_(-0.5/D, 0.5/D)
    bound = 0.5 / D
    center_emb = jax.random.uniform(k1, (vocab_size, D), jnp.float32, -bound, bound)
    context_emb = jax.random.uniform(k2, (vocab_size, D), jnp.float32, -bound, bound)

    center_words = jax.random.randint(k3, (B,), 0, vocab_size)
    context_words = jax.random.randint(k4, (B,), 0, vocab_size)

    # pos_scores as produced by SkipGramModel.forward
    pos_scores = jnp.sum(
        jnp.take(center_emb, center_words, axis=0)
        * jnp.take(context_emb, context_words, axis=0),
        axis=1,
    )

    # tile_b=8 here only so the tiny demo batch exercises a multi-tile grid;
    # the default (256) is what real batches should use.
    loss = negative_sampling_loss(pos_scores, center_words, center_emb,
                                  context_emb, K, k5, tile_b=8)
    jax.block_until_ready(loss)

    # cross-check against a pure-JAX reference (same negative samples)
    neg_words = jax.random.randint(k5, (B, K), 0, vocab_size)
    cen = jnp.take(center_emb, center_words, axis=0)
    neg = jnp.take(context_emb, neg_words.reshape(-1), axis=0).reshape(B, K, D)
    ref = _reference_loss(pos_scores, cen, neg)
    assert jnp.allclose(loss, ref, atol=1e-4, rtol=1e-5), (loss, ref)

    print("KERNEL_OK")
</pallas_src>

<mosaic_0001>
module attributes {stable_mosaic.version = 11 : i64} {
  func.func @nsl_kernel(%arg0: i32, %arg1: memref<40x1xi32, #tpu.memory_space<vmem>>, %arg2: memref<40x1xi32, #tpu.memory_space<vmem>>, %arg3: memref<8x1xf32, #tpu.memory_space<vmem>>, %arg4: memref<128x128xf32, #tpu.memory_space<vmem>>, %arg5: memref<128x128xf32, #tpu.memory_space<vmem>>, %arg6: memref<1x128xf32, #tpu.memory_space<vmem>>) attributes {dimension_semantics = [#tpu.dimension_semantics<parallel>], iteration_bounds = array<i64: 2>, scalar_prefetch = 0 : i64, scratch_operands = 0 : i64, tpu.core_type = #tpu.core_type<tc>, window_params = [{transform_indices = @transform_0, window_bounds = array<i64: 40, 1>}, {transform_indices = @transform_1, window_bounds = array<i64: 40, 1>}, {transform_indices = @transform_2, window_bounds = array<i64: 8, 1>}, {pipeline_mode = #tpu.pipeline_mode<synchronous>, transform_indices = @transform_3, window_bounds = array<i64: 128, 128>}, {pipeline_mode = #tpu.pipeline_mode<synchronous>, transform_indices = @transform_4, window_bounds = array<i64: 128, 128>}, {transform_indices = @transform_5, window_bounds = array<i64: 1, 128>}]} {
    %0 = tpu.iota {dimensions = array<i32: 1>} : vector<40x128xi32>
    %c0 = arith.constant 0 : index
    %c0_0 = arith.constant 0 : index
    %1 = vector.load %arg1[%c0, %c0_0] : memref<40x1xi32, #tpu.memory_space<vmem>>, vector<40x1xi32>
    %2 = vector.broadcast %1 : vector<40x1xi32> to vector<40x128xi32>
    %3 = arith.cmpi eq, %0, %2 : vector<40x128xi32>
    %4 = arith.extui %3 : vector<40x128xi1> to vector<40x128xi32>
    %5 = arith.sitofp %4 : vector<40x128xi32> to vector<40x128xf32>
    %c0_1 = arith.constant 0 : index
    %c0_2 = arith.constant 0 : index
    %6 = vector.load %arg2[%c0_1, %c0_2] : memref<40x1xi32, #tpu.memory_space<vmem>>, vector<40x1xi32>
    %7 = vector.broadcast %6 : vector<40x1xi32> to vector<40x128xi32>
    %8 = arith.cmpi eq, %0, %7 : vector<40x128xi32>
    %9 = arith.extui %8 : vector<40x128xi1> to vector<40x128xi32>
    %10 = arith.sitofp %9 : vector<40x128xi32> to vector<40x128xf32>
    %c0_3 = arith.constant 0 : index
    %c0_4 = arith.constant 0 : index
    %11 = vector.load %arg4[%c0_3, %c0_4] : memref<128x128xf32, #tpu.memory_space<vmem>>, vector<128x128xf32>
    %cst = arith.constant dense<0.000000e+00> : vector<40x128xf32>
    %12 = tpu.matmul %5, %11, %cst {dimension_numbers = #tpu.dot_dimension_numbers<[1], [0], [0], [1], [0, 0, 1, 1], [], []>} : vector<40x128xf32>, vector<128x128xf32>, vector<40x128xf32> -> vector<40x128xf32>
    %c0_5 = arith.constant 0 : index
    %c0_6 = arith.constant 0 : index
    %13 = vector.load %arg5[%c0_5, %c0_6] : memref<128x128xf32, #tpu.memory_space<vmem>>, vector<128x128xf32>
    %cst_7 = arith.constant dense<0.000000e+00> : vector<40x128xf32>
    %14 = tpu.matmul %10, %13, %cst_7 {dimension_numbers = #tpu.dot_dimension_numbers<[1], [0], [0], [1], [0, 0, 1, 1], [], []>} : vector<40x128xf32>, vector<128x128xf32>, vector<40x128xf32> -> vector<40x128xf32>
    %15 = arith.mulf %12, %14 : vector<40x128xf32>
    %cst_8 = arith.constant dense<0.000000e+00> : vector<40xf32>
    %16 = vector.multi_reduction <add>, %15, %cst_8 [1] : vector<40x128xf32> to vector<40xf32>
    %17 = vector.shape_cast %16 : vector<40xf32> to vector<40x1xf32>
    %18 = tpu.iota {dimensions = array<i32: 0>} : vector<40x1xi32>
    %c40_i32 = arith.constant 40 : i32
    %19 = arith.muli %arg0, %c40_i32 : i32
    %20 = vector.broadcast %19 : i32 to vector<40x1xi32>
    %21 = arith.addi %18, %20 : vector<40x1xi32>
    %c80_i32 = arith.constant 80 : i32
    %22 = vector.broadcast %c80_i32 : i32 to vector<40x1xi32>
    %23 = arith.cmpi slt, %21, %22 : vector<40x1xi32>
    %cst_9 = arith.constant 0.000000e+00 : f32
    %24 = vector.broadcast %cst_9 : f32 to vector<40x1xf32>
    %25 = arith.subf %24, %17 : vector<40x1xf32>
    %cst_10 = arith.constant 0.000000e+00 : f32
    %26 = vector.broadcast %cst_10 : f32 to vector<40x1xf32>
    %27 = arith.minimumf %25, %26 : vector<40x1xf32>
    %28 = math.absf %25 : vector<40x1xf32>
    %cst_11 = arith.constant 0.000000e+00 : f32
    %29 = vector.broadcast %cst_11 : f32 to vector<40x1xf32>
    %30 = arith.subf %29, %28 : vector<40x1xf32>
    %31 = math.exp %30 : vector<40x1xf32>
    %32 = math.log1p %31 : vector<40x1xf32>
    %33 = arith.subf %27, %32 : vector<40x1xf32>
    %cst_12 = arith.constant 0.000000e+00 : f32
    %34 = vector.broadcast %cst_12 : f32 to vector<40x1xf32>
    %35 = arith.select %23, %33, %34 : vector<40x1xi1>, vector<40x1xf32>
    %36 = vector.shape_cast %35 : vector<40x1xf32> to vector<1x40x1xf32>
    %cst_13 = arith.constant dense<0.000000e+00> : vector<1xf32>
    %37 = vector.multi_reduction <add>, %36, %cst_13 [1, 2] : vector<1x40x1xf32> to vector<1xf32>
    %38 = vector.shape_cast %37 : vector<1xf32> to vector<1x1x1xf32>
    %39 = vector.extract %38[0, 0, 0] : f32 from vector<1x1x1xf32>
    %40 = tpu.iota {dimensions = array<i32: 0>} : vector<8x1xi32>
    %c8_i32 = arith.constant 8 : i32
    %41 = arith.muli %arg0, %c8_i32 : i32
    %42 = vector.broadcast %41 : i32 to vector<8x1xi32>
    %43 = arith.addi %40, %42 : vector<8x1xi32>
    %c16_i32 = arith.constant 16 : i32
    %44 = vector.broadcast %c16_i32 : i32 to vector<8x1xi32>
    %45 = arith.cmpi slt, %43, %44 : vector<8x1xi32>
    %c0_14 = arith.constant 0 : index
    %c0_15 = arith.constant 0 : index
    %46 = vector.load %arg3[%c0_14, %c0_15] : memref<8x1xf32, #tpu.memory_space<vmem>>, vector<8x1xf32>
    %cst_16 = arith.constant 0.000000e+00 : f32
    %47 = vector.broadcast %cst_16 : f32 to vector<8x1xf32>
    %48 = arith.minimumf %46, %47 : vector<8x1xf32>
    %49 = math.absf %46 : vector<8x1xf32>
    %cst_17 = arith.constant 0.000000e+00 : f32
    %50 = vector.broadcast %cst_17 : f32 to vector<8x1xf32>
    %51 = arith.subf %50, %49 : vector<8x1xf32>
    %52 = math.exp %51 : vector<8x1xf32>
    %53 = math.log1p %52 : vector<8x1xf32>
    %54 = arith.subf %48, %53 : vector<8x1xf32>
    %cst_18 = arith.constant 0.000000e+00 : f32
    %55 = vector.broadcast %cst_18 : f32 to vector<8x1xf32>
    %56 = arith.select %45, %54, %55 : vector<8x1xi1>, vector<8x1xf32>
    %57 = vector.shape_cast %56 : vector<8x1xf32> to vector<1x8x1xf32>
    %cst_19 = arith.constant dense<0.000000e+00> : vector<1xf32>
    %58 = vector.multi_reduction <add>, %57, %cst_19 [1, 2] : vector<1x8x1xf32> to vector<1xf32>
    %59 = vector.shape_cast %58 : vector<1xf32> to vector<1x1x1xf32>
    %60 = vector.extract %59[0, 0, 0] : f32 from vector<1x1x1xf32>
    %61 = tpu.iota {dimensions = array<i32: 1>} : vector<1x128xi32>
    %c0_i32 = arith.constant 0 : i32
    %62 = vector.broadcast %c0_i32 : i32 to vector<1x128xi32>
    %63 = arith.cmpi eq, %61, %62 : vector<1x128xi32>
    %c1_i32 = arith.constant 1 : i32
    %64 = vector.broadcast %c1_i32 : i32 to vector<1x128xi32>
    %65 = arith.cmpi eq, %61, %64 : vector<1x128xi32>
    %cst_20 = arith.constant 0.000000e+00 : f32
    %66 = vector.broadcast %39 : f32 to vector<1x128xf32>
    %67 = vector.broadcast %cst_20 : f32 to vector<1x128xf32>
    %68 = arith.select %65, %66, %67 : vector<1x128xi1>, vector<1x128xf32>
    %69 = vector.broadcast %60 : f32 to vector<1x128xf32>
    %70 = arith.select %63, %69, %68 : vector<1x128xi1>, vector<1x128xf32>
    %c0_21 = arith.constant 0 : index
    %c0_22 = arith.constant 0 : index
    %71 = vector.load %arg6[%c0_21, %c0_22] : memref<1x128xf32, #tpu.memory_space<vmem>>, vector<1x128xf32>
    tpu.vector_store %arg6[%c0_21, %c0_22], %70 {strides = array<i32>} : memref<1x128xf32, #tpu.memory_space<vmem>>, vector<1x128xf32>,
    return
  }
  func.func @transform_0(%arg0: i32) -> (i32, i32) {
    %c0_i32 = arith.constant 0 : i32
    %c0_i32_0 = arith.constant 0 : i32
    return %arg0, %c0_i32 : i32, i32
  }
  func.func @transform_1(%arg0: i32) -> (i32, i32) {
    %c0_i32 = arith.constant 0 : i32
    %c0_i32_0 = arith.constant 0 : i32
    return %arg0, %c0_i32 : i32, i32
  }
  func.func @transform_2(%arg0: i32) -> (i32, i32) {
    %c0_i32 = arith.constant 0 : i32
    %c0_i32_0 = arith.constant 0 : i32
    return %arg0, %c0_i32 : i32, i32
  }
  func.func @transform_3(%arg0: i32) -> (i32, i32) {
    %c0_i32 = arith.constant 0 : i32
    %c0_i32_0 = arith.constant 0 : i32
    %c0_i32_1 = arith.constant 0 : i32
    return %c0_i32, %c0_i32_0 : i32, i32
  }
  func.func @transform_4(%arg0: i32) -> (i32, i32) {
    %c0_i32 = arith.constant 0 : i32
    %c0_i32_0 = arith.constant 0 : i32
    %c0_i32_1 = arith.constant 0 : i32
    return %c0_i32, %c0_i32_0 : i32, i32
  }
  func.func @transform_5(%arg0: i32) -> (i32, i32) {
    %c0_i32 = arith.constant 0 : i32
    %c0_i32_0 = arith.constant 0 : i32
    return %c0_i32, %arg0 : i32, i32
  }
}

</mosaic_0001>

<llo_original>
// kernel: tpu_custom_call.1
$region0: #{tpu_custom_call.1}
  #allocation0 [shape = 'u32[]', space=smem, size = 0x4, offset = 0x4, fixed_abs, tag = 'smem constant byte address 0x4 - core index']
  #allocation1 [shape = 'u32[144,128]{1,0:T(1,128)}', space=vmem, size = 0x12000, scoped, tag = 'internal scratch']
  %s0 = inlined_call_operand.vmem [shape: s32[80,1], index: 0, kind: input, shape index: {}]
  %s1 = inlined_call_operand.vmem [shape: s32[80,1], index: 1, kind: input, shape index: {}]
  %s2 = inlined_call_operand.vmem [shape: f32[16,1], index: 2, kind: input, shape index: {}]
  %s3 = inlined_call_operand.vmem [shape: f32[128,128], index: 3, kind: input, shape index: {}]
  %s4 = inlined_call_operand.hbm [shape: f32[128,128], index: 4, kind: input, shape index: {}]
  %s5 = inlined_call_operand.hbm [shape: f32[1,256], index: 5, kind: output, shape index: {}]
  %s6 = sld [smem:[#allocation0]]
  $region57: #{tpu_custom_call.1} parent=0
    _
  %s8 = ssub.s32 1, %s6
  %s9 = scalar_select 0, %s8, %s6
  $region1: #{tpu_custom_call.1} parent=0
    #allocation2 [shape = 'u8[65536]{0}', space=vmem, size = 0x10000, scoped, tag = 'input window, operand 4, single buffered']
    #allocation3 [shape = 's32[2]{0}', space=sflag, size = 0x8, scoped, tag = 'scoped memory for tpu_custom_call.1']
    #allocation4 [shape = 's32[2]{0}', space=sflag, size = 0x8, scoped, tag = 'scoped memory for tpu_custom_call.1']
    #allocation5 [shape = 'u8[1024]{0}', space=vmem, size = 0x400, scoped, tag = 'output window, operand 0']
    %10 = vsyncpa [#allocation3], 0
    %11 = vsyncpa [#allocation4], 0
    %s12 = scalar_lea.sflag [#allocation4], 1
    %13 = vsyncpa %s12, 0
    loop: start=0, step=1, limit=4
    $region2: #{tpu_custom_call.1} parent=1 // loop_pre_header
      _
    $region3: #{tpu_custom_call.1} parent=1 // loop_header
      %s15 = sphi 0, %s19
      %p16 = scmp.ge.s32.totalorder %s15, 4
      %s25 = sphi 0, %s27
      %s28 = sphi 0, %s25
      %s29 = sphi 0, %s28
      %s45 = sphi 0, %s29
      %s51 = sphi 0, %s53
      %s54 = sphi 0, %s51
      %s55 = sphi 0, %s54
      %s71 = sphi 0, %s55
      %s77 = sphi 0, %s79
      %s80 = sphi 0, %s77
      %s81 = sphi 0, %s80
      %s97 = sphi 0, %s81
      %s101 = sphi 0, %s101
      %s103 = sphi 0, %s101
      %s104 = sphi 0, %s103
      %s118 = sphi 0, %s104
      %s122 = sphi 0, %s122
      %s124 = sphi 0, %s122
      %s125 = sphi 0, %s124
      %s139 = sphi 0, %s125
      %s145 = sphi 0, %s147
      %s148 = sphi 0, %s145
      %s149 = sphi 0, %s148
      %s165 = sphi 0, %s149
    $region4: #{tpu_custom_call.1} parent=1 // loop_header_branch
      %18 = sbr.rel (%p16) target = $region8
    $region5: #{tpu_custom_call.1} parent=1 // loop_body
      %s20 = ssub.s32 %s15, 1
      %s21 = ssub.s32 %s15, 2
      %s22 = sadd.s32 %s15, 1
      %s23 = ssub.s32 %s15, %s22
      %p24 = scmp.eq.s32.totalorder %s23, 0
      %s26 = sadd.s32 %s25, 1
      %s27 = scalar_select %p24, %s25, %s26
      %p30 = pneg %p24
      %p31 = scmp.eq.s32.totalorder %s15, 1
      %p32 = por %p30, %p31
      %p33 = scmp.ne.s32.totalorder %s25, %s28
      %p34 = scmp.eq.s32.totalorder %s15, 0
      %p35 = por %p33, %p34
      %p36 = scmp.ne.s32.totalorder %s25, %s28
      %p37 = scmp.eq.s32.totalorder %s20, 1
      %p38 = por %p36, %p37
      %p39 = scmp.ne.s32.totalorder %s28, %s29
      %p40 = scmp.eq.s32.totalorder %s20, 0
      %p41 = por %p39, %p40
      %p42 = scmp.ne.s32.totalorder %s28, %s29
      %p43 = scmp.eq.s32.totalorder %s21, 1
      %p44 = por %p42, %p43
      %p46 = scmp.ne.s32.totalorder %s29, %s45
      %p47 = scmp.eq.s32.totalorder %s21, 0
      %p48 = por %p46, %p47
      %s49 = ssub.s32 %s15, %s22
      %p50 = scmp.eq.s32.totalorder %s49, 0
      %s52 = sadd.s32 %s51, 1
      %s53 = scalar_select %p50, %s51, %s52
      %p56 = pneg %p50
      %p57 = scmp.eq.s32.totalorder %s15, 1
      %p58 = por %p56, %p57
      %p59 = scmp.ne.s32.totalorder %s51, %s54
      %p60 = scmp.eq.s32.totalorder %s15, 0
      %p61 = por %p59, %p60
      %p62 = scmp.ne.s32.totalorder %s51, %s54
      %p63 = scmp.eq.s32.totalorder %s20, 1
      %p64 = por %p62, %p63
      %p65 = scmp.ne.s32.totalorder %s54, %s55
      %p66 = scmp.eq.s32.totalorder %s20, 0
      %p67 = por %p65, %p66
      %p68 = scmp.ne.s32.totalorder %s54, %s55
      %p69 = scmp.eq.s32.totalorder %s21, 1
      %p70 = por %p68, %p69
      %p72 = scmp.ne.s32.totalorder %s55, %s71
      %p73 = scmp.eq.s32.totalorder %s21, 0
      %p74 = por %p72, %p73
      %s75 = ssub.s32 %s15, %s22
      %p76 = scmp.eq.s32.totalorder %s75, 0
      %s78 = sadd.s32 %s77, 1
      %s79 = scalar_select %p76, %s77, %s78
      %p82 = pneg %p76
      %p83 = scmp.eq.s32.totalorder %s15, 1
      %p84 = por %p82, %p83
      %p85 = scmp.ne.s32.totalorder %s77, %s80
      %p86 = scmp.eq.s32.totalorder %s15, 0
      %p87 = por %p85, %p86
      %p88 = scmp.ne.s32.totalorder %s77, %s80
      %p89 = scmp.eq.s32.totalorder %s20, 1
      %p90 = por %p88, %p89
      %p91 = scmp.ne.s32.totalorder %s80, %s81
      %p92 = scmp.eq.s32.totalorder %s20, 0
      %p93 = por %p91, %p92
      %p94 = scmp.ne.s32.totalorder %s80, %s81
      %p95 = scmp.eq.s32.totalorder %s21, 1
      %p96 = por %p94, %p95
      %p98 = scmp.ne.s32.totalorder %s81, %s97
      %p99 = scmp.eq.s32.totalorder %s21, 0
      %p100 = por %p98, %p99
      %s102 = sadd.s32 %s101, 1
      %p105 = scmp.eq.s32.totalorder %s15, 1
      %p106 = scmp.ne.s32.totalorder %s101, %s103
      %p107 = scmp.eq.s32.totalorder %s15, 0
      %p108 = por %p106, %p107
      %p109 = scmp.ne.s32.totalorder %s101, %s103
      %p110 = scmp.eq.s32.totalorder %s20, 1
      %p111 = por %p109, %p110
      %p112 = scmp.ne.s32.totalorder %s103, %s104
      %p113 = scmp.eq.s32.totalorder %s20, 0
      %p114 = por %p112, %p113
      %p115 = scmp.ne.s32.totalorder %s103, %s104
      %p116 = scmp.eq.s32.totalorder %s21, 1
      %p117 = por %p115, %p116
      %p119 = scmp.ne.s32.totalorder %s104, %s118
      %p120 = scmp.eq.s32.totalorder %s21, 0
      %p121 = por %p119, %p120
      %s123 = sadd.s32 %s122, 1
      %p126 = scmp.eq.s32.totalorder %s15, 1
      %p127 = scmp.ne.s32.totalorder %s122, %s124
      %p128 = scmp.eq.s32.totalorder %s15, 0
      %p129 = por %p127, %p128
      %p130 = scmp.ne.s32.totalorder %s122, %s124
      %p131 = scmp.eq.s32.totalorder %s20, 1
      %p132 = por %p130, %p131
      %p133 = scmp.ne.s32.totalorder %s124, %s125
      %p134 = scmp.eq.s32.totalorder %s20, 0
      %p135 = por %p133, %p134
      %p136 = scmp.ne.s32.totalorder %s124, %s125
      %p137 = scmp.eq.s32.totalorder %s21, 1
      %p138 = por %p136, %p137
      %p140 = scmp.ne.s32.totalorder %s125, %s139
      %p141 = scmp.eq.s32.totalorder %s21, 0
      %p142 = por %p140, %p141
      %s143 = ssub.s32 %s15, %s22
      %p144 = scmp.eq.s32.totalorder %s143, 0
      %s146 = sadd.s32 %s145, 1
      %s147 = scalar_select %p144, %s145, %s146
      %p150 = pneg %p144
      %p151 = scmp.eq.s32.totalorder %s15, 1
      %p152 = por %p150, %p151
      %p153 = scmp.ne.s32.totalorder %s145, %s148
      %p154 = scmp.eq.s32.totalorder %s15, 0
      %p155 = por %p153, %p154
      %p156 = scmp.ne.s32.totalorder %s145, %s148
      %p157 = scmp.eq.s32.totalorder %s20, 1
      %p158 = por %p156, %p157
      %p159 = scmp.ne.s32.totalorder %s148, %s149
      %p160 = scmp.eq.s32.totalorder %s20, 0
      %p161 = por %p159, %p160
      %p162 = scmp.ne.s32.totalorder %s148, %s149
      %p163 = scmp.eq.s32.totalorder %s21, 1
      %p164 = por %p162, %p163
      %p166 = scmp.ne.s32.totalorder %s149, %s165
      %p167 = scmp.eq.s32.totalorder %s21, 0
      %p168 = por %p166, %p167
      %p169 = scmp.le.s32.totalorder 1, %s15
      %p170 = scmp.lt.s32.totalorder %s15, 3
      %p171 = pnand %p169, %p170
      %p172 = pneg %p171
      // Predicated region
      $region9: #{tpu_custom_call.1} parent=5 // pred_check
        _
      $region10: #{tpu_custom_call.1} parent=5 // pred_check_branch
        %174 = sbr.rel (%p171) target = $region12
      $region11: #{tpu_custom_call.1} parent=5 // pred_region
        %s175 = ssub.s32 %s15, 1
        // Predicated region
        $region13: #{tpu_custom_call.1} parent=11 // pred_check
          %p176 = pneg %p114
        $region14: #{tpu_custom_call.1} parent=11 // pred_check_branch
          %178 = sbr.rel (%p176) target = $region16
        $region15: #{tpu_custom_call.1} parent=11 // pred_region
          _
        $region16: #{tpu_custom_call.1} parent=11 // pred_fallthru
          _
        // Predicated region
        $region17: #{tpu_custom_call.1} parent=11 // pred_check
          %p179 = pneg %p135
        $region18: #{tpu_custom_call.1} parent=11 // pred_check_branch
          %181 = sbr.rel (%p179) target = $region20
        $region19: #{tpu_custom_call.1} parent=11 // pred_region
          %s183 = ssub.s32 2048, 2048
          %184 = vsyncadd [#allocation3], %s183
          %s185 = sshll.u32 [#allocation2], 4
          %s186 = int_to_ptr.vmem [resolvable:$true] %s185
          %191 = dma.hbm_to_vmem [thread:$0]  %s4, 2048, %s186, [#allocation3], 128, 128, 8
        $region20: #{tpu_custom_call.1} parent=11 // pred_fallthru
          _
      $region12: #{tpu_custom_call.1} parent=5 // pred_fallthru
        _
      %p192 = scmp.lt.s32.totalorder %s15, 2
      // Predicated region
      $region21: #{tpu_custom_call.1} parent=5 // pred_check
        %p193 = pneg %p192
      $region22: #{tpu_custom_call.1} parent=5 // pred_check_branch
        %195 = sbr.rel (%p193) target = $region24
      $region23: #{tpu_custom_call.1} parent=5 // pred_region
        // Predicated region
        $region25: #{tpu_custom_call.1} parent=23 // pred_check
          %p196 = pneg %p35
        $region26: #{tpu_custom_call.1} parent=23 // pred_check_branch
          %198 = sbr.rel (%p196) target = $region28
        $region27: #{tpu_custom_call.1} parent=23 // pred_region
          %s199 = smul.u32 5, %s15
          %p200 = scmp.lt.s32.totalorder %s199, 9
          %s201 = scalar_select %p200, %s199, 9
          %s202 = smul.addr %s201, 8
          %s203 = scalar_lea.vmem %s0, %s202
          %s204 = smul.u32 5, %s15
        $region28: #{tpu_custom_call.1} parent=23 // pred_fallthru
          _
        // Predicated region
        $region29: #{tpu_custom_call.1} parent=23 // pred_check
          %p205 = pneg %p61
        $region30: #{tpu_custom_call.1} parent=23 // pred_check_branch
          %207 = sbr.rel (%p205) target = $region32
        $region31: #{tpu_custom_call.1} parent=23 // pred_region
          %s208 = smul.u32 5, %s15
          %p209 = scmp.lt.s32.totalorder %s208, 9
          %s210 = scalar_select %p209, %s208, 9
          %s211 = smul.addr %s210, 8
          %s212 = scalar_lea.vmem %s1, %s211
          %s213 = smul.u32 5, %s15
        $region32: #{tpu_custom_call.1} parent=23 // pred_fallthru
          _
        // Predicated region
        $region33: #{tpu_custom_call.1} parent=23 // pred_check
          %p214 = pneg %p87
        $region34: #{tpu_custom_call.1} parent=23 // pred_check_branch
          %216 = sbr.rel (%p214) target = $region36
        $region35: #{tpu_custom_call.1} parent=23 // pred_region
          %p217 = scmp.lt.s32.totalorder %s15, 1
          %s218 = scalar_select %p217, %s15, 1
          %s219 = smul.addr %s218, 8
          %s220 = scalar_lea.vmem %s2, %s219
        $region36: #{tpu_custom_call.1} parent=23 // pred_fallthru
          _
      $region24: #{tpu_custom_call.1} parent=5 // pred_fallthru
        _
      %p221 = scmp.le.s32.totalorder 1, %s15
      %p222 = scmp.lt.s32.totalorder %s15, 3
      %p223 = pnand %p221, %p222
      %p224 = pneg %p223
      // Predicated region
      $region37: #{tpu_custom_call.1} parent=5 // pred_check
        _
      $region38: #{tpu_custom_call.1} parent=5 // pred_check_branch
        %226 = sbr.rel (%p223) target = $region40
      $region39: #{tpu_custom_call.1} parent=5 // pred_region
        %s227 = ssub.s32 %s15, 1
        // Predicated region
        $region41: #{tpu_custom_call.1} parent=39 // pred_check
          %p228 = pneg %p135
        $region42: #{tpu_custom_call.1} parent=39 // pred_check_branch
          %230 = sbr.rel (%p228) target = $region44
        $region43: #{tpu_custom_call.1} parent=39 // pred_region
          %231 = dma.done [#allocation3], 2048
        $region44: #{tpu_custom_call.1} parent=39 // pred_fallthru
          _
        %s232 = smul.u32 5, %s20
        %p233 = scmp.lt.s32.totalorder %s232, 9
        %s234 = scalar_select %p233, %s232, 9
        %s235 = smul.addr %s234, 8
        %s236 = scalar_lea.vmem %s0, %s235
        %p237 = pneg %p41
        %p238 = pneg %p38
        %s239 = smul.u32 5, %s20
        %p240 = scmp.lt.s32.totalorder %s239, 9
        %s241 = scalar_select %p240, %s239, 9
        %s242 = smul.addr %s241, 8
        %s243 = scalar_lea.vmem %s1, %s242
        %p244 = pneg %p67
        %p245 = pneg %p64
        %p246 = scmp.lt.s32.totalorder %s20, 1
        %s247 = scalar_select %p246, %s20, 1
        %s248 = smul.addr %s247, 8
        %s249 = scalar_lea.vmem %s2, %s248
        %p250 = pneg %p93
        %p251 = pneg %p90
        %p252 = pneg %p114
        %p253 = pneg %p111
        %p254 = pneg %p135
        %p255 = pneg %p132
        %p256 = pneg %p161
        %p257 = pneg %p158
        %s258 = sand.u32 %s148, 1
        %s259 = scalar_lea.sflag [#allocation4], %s258
        %s260 = sand.u32 %s148, 1
        %s261 = scalar_lea.vmem [#allocation5], %s260
        %s262 = smul.u32 5, %s20
        %p263 = scmp.lt.s32.totalorder %s262, 9
        %s264 = scalar_select %p263, %s262, 9
        %s265 = smul.addr %s264, 8
        %s266 = scalar_lea.vmem %s0, %s265
        %s267 = smul.u32 5, %s20
        %s268 = smul.u32 5, %s20
        %p269 = scmp.lt.s32.totalorder %s268, 9
        %s270 = scalar_select %p269, %s268, 9
        %s271 = smul.addr %s270, 8
        %s272 = scalar_lea.vmem %s1, %s271
        %s273 = smul.u32 5, %s20
        %p274 = scmp.lt.s32.totalorder %s20, 1
        %s275 = scalar_select %p274, %s20, 1
        %s276 = smul.addr %s275, 8
        %s277 = scalar_lea.vmem %s2, %s276
        %v278 = vlaneseq
        %v279 = vand.u32 %v278, 127
        %v280 = vld [vmem:[%s266] sm:$0xff]
        %v281 = vld [vmem:[%s266 + $0x8] sm:$0xff]
        %v282 = vld [vmem:[%s266 + $0x10] sm:$0xff]
        %v283 = vld [vmem:[%s266 + $0x18] sm:$0xff]
        %v284 = vld [vmem:[%s266 + $0x20] sm:$0xff]
        %285 = vset.pattern.permute.xlu0 0
        %286 = vperm.xlu0 %285, %v280
        %v287 = vpop.permute.xlu0 %286
        %288 = vset.pattern.permute.xlu0 0
        %289 = vperm.xlu0 %288, %v281
        %v290 = vpop.permute.xlu0 %289
        %291 = vset.pattern.permute.xlu0 0
        %292 = vperm.xlu0 %291, %v282
        %v293 = vpop.permute.xlu0 %292
        %294 = vset.pattern.permute.xlu0 0
        %295 = vperm.xlu0 %294, %v283
        %v296 = vpop.permute.xlu0 %295
        %297 = vset.pattern.permute.xlu0 0
        %298 = vperm.xlu0 %297, %v284
        %v299 = vpop.permute.xlu0 %298
        %vm300 = vcmp.eq.s32.totalorder %v279, %v287
        %vm301 = vcmp.eq.s32.totalorder %v279, %v290
        %vm302 = vcmp.eq.s32.totalorder %v279, %v293
        %vm303 = vcmp.eq.s32.totalorder %v279, %v296
        %vm304 = vcmp.eq.s32.totalorder %v279, %v299
        %v305 = vsel %vm300, 1, 0
        %v306 = vsel %vm301, 1, 0
        %v307 = vsel %vm302, 1, 0
        %v308 = vsel %vm303, 1, 0
        %v309 = vsel %vm304, 1, 0
        %v310 = vcvt.s32.f32 %v305
        %v311 = vcvt.s32.f32 %v306
        %v312 = vcvt.s32.f32 %v307
        %v313 = vcvt.s32.f32 %v308
        %v314 = vcvt.s32.f32 %v309
        %v315 = vld [vmem:[%s272] sm:$0xff]
        %v316 = vld [vmem:[%s272 + $0x8] sm:$0xff]
        %v317 = vld [vmem:[%s272 + $0x10] sm:$0xff]
        %v318 = vld [vmem:[%s272 + $0x18] sm:$0xff]
        %v319 = vld [vmem:[%s272 + $0x20] sm:$0xff]
        %320 = vset.pattern.permute.xlu0 0
        %321 = vperm.xlu0 %320, %v315
        %v322 = vpop.permute.xlu0 %321
        %323 = vset.pattern.permute.xlu0 0
        %324 = vperm.xlu0 %323, %v316
        %v325 = vpop.permute.xlu0 %324
        %326 = vset.pattern.permute.xlu0 0
        %327 = vperm.xlu0 %326, %v317
        %v328 = vpop.permute.xlu0 %327
        %329 = vset.pattern.permute.xlu0 0
        %330 = vperm.xlu0 %329, %v318
        %v331 = vpop.permute.xlu0 %330
        %332 = vset.pattern.permute.xlu0 0
        %333 = vperm.xlu0 %332, %v319
        %v334 = vpop.permute.xlu0 %333
        %vm335 = vcmp.eq.s32.totalorder %v279, %v322
        %vm336 = vcmp.eq.s32.totalorder %v279, %v325
        %vm337 = vcmp.eq.s32.totalorder %v279, %v328
        %vm338 = vcmp.eq.s32.totalorder %v279, %v331
        %vm339 = vcmp.eq.s32.totalorder %v279, %v334
        %v340 = vsel %vm335, 1, 0
        %v341 = vsel %vm336, 1, 0
        %v342 = vsel %vm337, 1, 0
        %v343 = vsel %vm338, 1, 0
        %v344 = vsel %vm339, 1, 0
        %v345 = vcvt.s32.f32 %v340
        %v346 = vcvt.s32.f32 %v341
        %v347 = vcvt.s32.f32 %v342
        %v348 = vcvt.s32.f32 %v343
        %v349 = vcvt.s32.f32 %v344
        %v350 = vld [vmem:[%s3] sm:$0xff]
        %v351 = vld [vmem:[%s3 + $0x8] sm:$0xff]
        %v352 = vld [vmem:[%s3 + $0x10] sm:$0xff]
        %v353 = vld [vmem:[%s3 + $0x18] sm:$0xff]
        %v354 = vld [vmem:[%s3 + $0x20] sm:$0xff]
        %v355 = vld [vmem:[%s3 + $0x28] sm:$0xff]
        %v356 = vld [vmem:[%s3 + $0x30] sm:$0xff]
        %v357 = vld [vmem:[%s3 + $0x38] sm:$0xff]
        %v358 = vld [vmem:[%s3 + $0x40] sm:$0xff]
        %v359 = vld [vmem:[%s3 + $0x48] sm:$0xff]
        %v360 = vld [vmem:[%s3 + $0x50] sm:$0xff]
        %v361 = vld [vmem:[%s3 + $0x58] sm:$0xff]
        %v362 = vld [vmem:[%s3 + $0x60] sm:$0xff]
        %v363 = vld [vmem:[%s3 + $0x68] sm:$0xff]
        %v364 = vld [vmem:[%s3 + $0x70] sm:$0xff]
        %v365 = vld [vmem:[%s3 + $0x78] sm:$0xff]
        %366 = vmatprep.subr.mxu0 0.0
        %367 = vmatpush1.msra.mxu0 %v350
        %368 = vmatprep.subr.mxu0 0.0
        %369 = vmatpush1.msra.mxu0 %v351
        %370 = vmatprep.subr.mxu0 0.0
        %371 = vmatpush1.msra.mxu0 %v352
        %372 = vmatprep.subr.mxu0 0.0
        %373 = vmatpush1.msra.mxu0 %v353
        %374 = vmatprep.subr.mxu0 0.0
        %375 = vmatpush1.msra.mxu0 %v354
        %376 = vmatprep.subr.mxu0 0.0
        %377 = vmatpush1.msra.mxu0 %v355
        %378 = vmatprep.subr.mxu0 0.0
        %379 = vmatpush1.msra.mxu0 %v356
        %380 = vmatprep.subr.mxu0 0.0
        %381 = vmatpush1.msra.mxu0 %v357
        %382 = vmatprep.subr.mxu0 0.0
        %383 = vmatpush1.msra.mxu0 %v358
        %384 = vmatprep.subr.mxu0 0.0
        %385 = vmatpush1.msra.mxu0 %v359
        %386 = vmatprep.subr.mxu0 0.0
        %387 = vmatpush1.msra.mxu0 %v360
        %388 = vmatprep.subr.mxu0 0.0
        %389 = vmatpush1.msra.mxu0 %v361
        %390 = vmatprep.subr.mxu0 0.0
        %391 = vmatpush1.msra.mxu0 %v362
        %392 = vmatprep.subr.mxu0 0.0
        %393 = vmatpush1.msra.mxu0 %v363
        %394 = vmatprep.subr.mxu0 0.0
        %395 = vmatpush1.msra.mxu0 %v364
        %396 = vmatprep.subr.mxu0 0.0
        %397 = vmatpush1.msra.mxu0 %v365
        %398 = vmatprep.subr.mxu0 0.0
        %399 = vmatpush1.msra.mxu0 0.0
        %400 = vmatprep.subr.mxu0 0.0
        %401 = vmatpush1.msra.mxu0 0.0
        %402 = vmatprep.subr.mxu0 0.0
        %403 = vmatpush1.msra.mxu0 0.0
        %404 = vmatprep.subr.mxu0 0.0
        %405 = vmatpush1.msra.mxu0 0.0
        %406 = vmatprep.subr.mxu0 0.0
        %407 = vmatpush1.msra.mxu0 0.0
        %408 = vmatprep.subr.mxu0 0.0
        %409 = vmatpush1.msra.mxu0 0.0
        %410 = vmatprep.subr.mxu0 0.0
        %411 = vmatpush1.msra.mxu0 0.0
        %412 = vmatprep.subr.mxu0 0.0
        %413 = vmatpush1.msra.mxu0 0.0
        %414 = vmatprep.subr.mxu0 0.0
        %415 = vmatpush1.msra.mxu0 0.0
        %416 = vmatprep.subr.mxu0 0.0
        %417 = vmatpush1.msra.mxu0 0.0
        %418 = vmatprep.subr.mxu0 0.0
        %419 = vmatpush1.msra.mxu0 0.0
        %420 = vmatprep.subr.mxu0 0.0
        %421 = vmatpush1.msra.mxu0 0.0
        %422 = vmatprep.subr.mxu0 0.0
        %423 = vmatpush1.msra.mxu0 0.0
        %424 = vmatprep.subr.mxu0 0.0
        %425 = vmatpush1.msra.mxu0 0.0
        %426 = vmatprep.subr.mxu0 0.0
        %427 = vmatpush1.msra.mxu0 0.0
        %428 = vmatprep.subr.mxu0 0.0
        %429 = vmatpush1.msra.mxu0 0.0
        %430 = vmatprep.mubr.f32.mxu0 0.0
        %431 = vmatmul.mubr.f32.gmra.mrb[0].mxu0 %v310
        %v432 = vpop.f32.mrb[0].mxu0
        %v433 = vadd.f32 0.0, %v432
        %v434 = vpop.f32.mrb[0].mxu0
        %435 = vmatprep.mubr.f32.mxu0 0.0
        %436 = vmatmul.mubr.f32.gmra.mrb[0].mxu0 %v311
        %v437 = vpop.f32.mrb[0].mxu0
        %v438 = vadd.f32 0.0, %v437
        %v439 = vpop.f32.mrb[0].mxu0
        %440 = vmatprep.mubr.f32.mxu0 0.0
        %441 = vmatmul.mubr.f32.gmra.mrb[0].mxu0 %v312
        %v442 = vpop.f32.mrb[0].mxu0
        %v443 = vadd.f32 0.0, %v442
        %v444 = vpop.f32.mrb[0].mxu0
        %445 = vmatprep.mubr.f32.mxu0 0.0
        %446 = vmatmul.mubr.f32.gmra.mrb[0].mxu0 %v313
        %v447 = vpop.f32.mrb[0].mxu0
        %v448 = vadd.f32 0.0, %v447
        %v449 = vpop.f32.mrb[0].mxu0
        %450 = vmatprep.mubr.f32.mxu0 0.0
        %451 = vmatmul.mubr.f32.gmra.mrb[0].mxu0 %v314
        %v452 = vpop.f32.mrb[0].mxu0
        %v453 = vadd.f32 0.0, %v452
        %v454 = vpop.f32.mrb[0].mxu0
        %455 = vdwg.mxu0
        %v456 = vld [vmem:[#allocation2] sm:$0xff]
        %v457 = vld [vmem:[#allocation2 + $0x8] sm:$0xff]
        %v458 = vld [vmem:[#allocation2 + $0x10] sm:$0xff]
        %v459 = vld [vmem:[#allocation2 + $0x18] sm:$0xff]
        %v460 = vld [vmem:[#allocation2 + $0x20] sm:$0xff]
        %v461 = vld [vmem:[#allocation2 + $0x28] sm:$0xff]
        %v462 = vld [vmem:[#allocation2 + $0x30] sm:$0xff]
        %v463 = vld [vmem:[#allocation2 + $0x38] sm:$0xff]
        %v464 = vld [vmem:[#allocation2 + $0x40] sm:$0xff]
        %v465 = vld [vmem:[#allocation2 + $0x48] sm:$0xff]
        %v466 = vld [vmem:[#allocation2 + $0x50] sm:$0xff]
        %v467 = vld [vmem:[#allocation2 + $0x58] sm:$0xff]
        %v468 = vld [vmem:[#allocation2 + $0x60] sm:$0xff]
        %v469 = vld [vmem:[#allocation2 + $0x68] sm:$0xff]
        %v470 = vld [vmem:[#allocation2 + $0x70] sm:$0xff]
        %v471 = vld [vmem:[#allocation2 + $0x78] sm:$0xff]
        %472 = vmatprep.subr.mxu0 0.0
        %473 = vmatpush1.msra.mxu0 %v456
        %474 = vmatprep.subr.mxu0 0.0
        %475 = vmatpush1.msra.mxu0 %v457
        %476 = vmatprep.subr.mxu0 0.0
        %477 = vmatpush1.msra.mxu0 %v458
        %478 = vmatprep.subr.mxu0 0.0
        %479 = vmatpush1.msra.mxu0 %v459
        %480 = vmatprep.subr.mxu0 0.0
        %481 = vmatpush1.msra.mxu0 %v460
        %482 = vmatprep.subr.mxu0 0.0
        %483 = vmatpush1.msra.mxu0 %v461
        %484 = vmatprep.subr.mxu0 0.0
        %485 = vmatpush1.msra.mxu0 %v462
        %486 = vmatprep.subr.mxu0 0.0
        %487 = vmatpush1.msra.mxu0 %v463
        %488 = vmatprep.subr.mxu0 0.0
        %489 = vmatpush1.msra.mxu0 %v464
        %490 = vmatprep.subr.mxu0 0.0
        %491 = vmatpush1.msra.mxu0 %v465
        %492 = vmatprep.subr.mxu0 0.0
        %493 = vmatpush1.msra.mxu0 %v466
        %494 = vmatprep.subr.mxu0 0.0
        %495 = vmatpush1.msra.mxu0 %v467
        %496 = vmatprep.subr.mxu0 0.0
        %497 = vmatpush1.msra.mxu0 %v468
        %498 = vmatprep.subr.mxu0 0.0
        %499 = vmatpush1.msra.mxu0 %v469
        %500 = vmatprep.subr.mxu0 0.0
        %501 = vmatpush1.msra.mxu0 %v470
        %502 = vmatprep.subr.mxu0 0.0
        %503 = vmatpush1.msra.mxu0 %v471
        %504 = vmatprep.subr.mxu0 0.0
        %505 = vmatpush1.msra.mxu0 0.0
        %506 = vmatprep.subr.mxu0 0.0
        %507 = vmatpush1.msra.mxu0 0.0
        %508 = vmatprep.subr.mxu0 0.0
        %509 = vmatpush1.msra.mxu0 0.0
        %510 = vmatprep.subr.mxu0 0.0
        %511 = vmatpush1.msra.mxu0 0.0
        %512 = vmatprep.subr.mxu0 0.0
        %513 = vmatpush1.msra.mxu0 0.0
        %514 = vmatprep.subr.mxu0 0.0
        %515 = vmatpush1.msra.mxu0 0.0
        %516 = vmatprep.subr.mxu0 0.0
        %517 = vmatpush1.msra.mxu0 0.0
        %518 = vmatprep.subr.mxu0 0.0
        %519 = vmatpush1.msra.mxu0 0.0
        %520 = vmatprep.subr.mxu0 0.0
        %521 = vmatpush1.msra.mxu0 0.0
        %522 = vmatprep.subr.mxu0 0.0
        %523 = vmatpush1.msra.mxu0 0.0
        %524 = vmatprep.subr.mxu0 0.0
        %525 = vmatpush1.msra.mxu0 0.0
        %526 = vmatprep.subr.mxu0 0.0
        %527 = vmatpush1.msra.mxu0 0.0
        %528 = vmatprep.subr.mxu0 0.0
        %529 = vmatpush1.msra.mxu0 0.0
        %530 = vmatprep.subr.mxu0 0.0
        %531 = vmatpush1.msra.mxu0 0.0
        %532 = vmatprep.subr.mxu0 0.0
        %533 = vmatpush1.msra.mxu0 0.0
        %534 = vmatprep.subr.mxu0 0.0
        %535 = vmatpush1.msra.mxu0 0.0
        %536 = vmatprep.mubr.f32.mxu0 0.0
        %537 = vmatmul.mubr.f32.gmra.mrb[0].mxu0 %v345
        %v538 = vpop.f32.mrb[0].mxu0
        %v539 = vadd.f32 0.0, %v538
        %v540 = vpop.f32.mrb[0].mxu0
        %541 = vmatprep.mubr.f32.mxu0 0.0
        %542 = vmatmul.mubr.f32.gmra.mrb[0].mxu0 %v346
        %v543 = vpop.f32.mrb[0].mxu0
        %v544 = vadd.f32 0.0, %v543
        %v545 = vpop.f32.mrb[0].mxu0
        %546 = vmatprep.mubr.f32.mxu0 0.0
        %547 = vmatmul.mubr.f32.gmra.mrb[0].mxu0 %v347
        %v548 = vpop.f32.mrb[0].mxu0
        %v549 = vadd.f32 0.0, %v548
        %v550 = vpop.f32.mrb[0].mxu0
        %551 = vmatprep.mubr.f32.mxu0 0.0
        %552 = vmatmul.mubr.f32.gmra.mrb[0].mxu0 %v348
        %v553 = vpop.f32.mrb[0].mxu0
        %v554 = vadd.f32 0.0, %v553
        %v555 = vpop.f32.mrb[0].mxu0
        %556 = vmatprep.mubr.f32.mxu0 0.0
        %557 = vmatmul.mubr.f32.gmra.mrb[0].mxu0 %v349
        %v558 = vpop.f32.mrb[0].mxu0
        %v559 = vadd.f32 0.0, %v558
        %v560 = vpop.f32.mrb[0].mxu0
        %561 = vdwg.mxu0
        %v562 = vmul.f32 %v433, %v539
        %v563 = vmul.f32 %v438, %v544
        %v564 = vmul.f32 %v443, %v549
        %v565 = vmul.f32 %v448, %v554
        %v566 = vmul.f32 %v453, %v559
        %567 = vadd.xlane.f32.xlu0 %v562
        %v568 = vpop.xlane.xlu0 %567
        %569 = vadd.xlane.f32.xlu0 %v563
        %v570 = vpop.xlane.xlu0 %569
        %571 = vadd.xlane.f32.xlu0 %v564
        %v572 = vpop.xlane.xlu0 %571
        %573 = vadd.xlane.f32.xlu0 %v565
        %v574 = vpop.xlane.xlu0 %573
        %575 = vadd.xlane.f32.xlu0 %v566
        %v576 = vpop.xlane.xlu0 %575
        %v577 = vlaneseq
        %v578 = vshrl.u32 %v577, 7
        %v579 = vadd.s32 %v578, 8
        %v580 = vadd.s32 %v578, 16
        %v581 = vadd.s32 %v578, 24
        %v582 = vadd.s32 %v578, 32
        %s583 = smul.u32 %s20, 40
        %v584 = vstv %s583
        %v585 = vadd.s32 %v578, %v584
        %v586 = vadd.s32 %v579, %v584
        %v587 = vadd.s32 %v580, %v584
        %v588 = vadd.s32 %v581, %v584
        %v589 = vadd.s32 %v582, %v584
        %vm590 = vcmp.lt.s32.totalorder %v585, 80
        %vm591 = vcmp.lt.s32.totalorder %v586, 80
        %vm592 = vcmp.lt.s32.totalorder %v587, 80
        %vm593 = vcmp.lt.s32.totalorder %v588, 80
        %vm594 = vcmp.lt.s32.totalorder %v589, 80
        %v595 = vsub.f32 0.0, %v568
        %v596 = vsub.f32 0.0, %v570
        %v597 = vsub.f32 0.0, %v572
        %v598 = vsub.f32 0.0, %v574
        %v599 = vsub.f32 0.0, %v576
        %v600 = vmin.f32 %v595, 0.0
        %v601 = vmin.f32 %v596, 0.0
        %v602 = vmin.f32 %v597, 0.0
        %v603 = vmin.f32 %v598, 0.0
        %v604 = vmin.f32 %v599, 0.0
        %v605 = vand.u32 2147483647, %v595
        %v606 = vand.u32 2147483647, %v596
        %v607 = vand.u32 2147483647, %v597
        %v608 = vand.u32 2147483647, %v598
        %v609 = vand.u32 2147483647, %v599
        %v610 = vsub.f32 0.0, %v605
        %v611 = vsub.f32 0.0, %v606
        %v612 = vsub.f32 0.0, %v607
        %v613 = vsub.f32 0.0, %v608
        %v614 = vsub.f32 0.0, %v609
        %v615 = vmul.f32 %v610, 1.442695
        %v616 = vpow.pop %v615
        %v617 = vmul.f32 %v611, 1.442695
        %v618 = vpow.pop %v617
        %v619 = vmul.f32 %v612, 1.442695
        %v620 = vpow.pop %v619
        %v621 = vmul.f32 %v613, 1.442695
        %v622 = vpow.pop %v621
        %v623 = vmul.f32 %v614, 1.442695
        %v624 = vpow.pop %v623
        %v625 = vadd.f32 %v616, 1.0
        %v626 = vlog2.pop %v625
        %v627 = vmul.f32 %v626, 0.6931472
        %v628 = vmul.f32 -0.5, %v616
        %v629 = vadd.f32 %v628, 1.0
        %v630 = vmul.f32 %v629, %v616
        %v631 = vand.u32 2147483647, %v616
        %vm632 = vcmp.lt.f32.partialorder %v631, 0.0004427343
        %v633 = vsel %vm632, %v630, %v627
        %v634 = vadd.f32 %v618, 1.0
        %v635 = vlog2.pop %v634
        %v636 = vmul.f32 %v635, 0.6931472
        %v637 = vmul.f32 -0.5, %v618
        %v638 = vadd.f32 %v637, 1.0
        %v639 = vmul.f32 %v638, %v618
        %v640 = vand.u32 2147483647, %v618
        %vm641 = vcmp.lt.f32.partialorder %v640, 0.0004427343
        %v642 = vsel %vm641, %v639, %v636
        %v643 = vadd.f32 %v620, 1.0
        %v644 = vlog2.pop %v643
        %v645 = vmul.f32 %v644, 0.6931472
        %v646 = vmul.f32 -0.5, %v620
        %v647 = vadd.f32 %v646, 1.0
        %v648 = vmul.f32 %v647, %v620
        %v649 = vand.u32 2147483647, %v620
        %vm650 = vcmp.lt.f32.partialorder %v649, 0.0004427343
        %v651 = vsel %vm650, %v648, %v645
        %v652 = vadd.f32 %v622, 1.0
        %v653 = vlog2.pop %v652
        %v654 = vmul.f32 %v653, 0.6931472
        %v655 = vmul.f32 -0.5, %v622
        %v656 = vadd.f32 %v655, 1.0
        %v657 = vmul.f32 %v656, %v622
        %v658 = vand.u32 2147483647, %v622
        %vm659 = vcmp.lt.f32.partialorder %v658, 0.0004427343
        %v660 = vsel %vm659, %v657, %v654
        %v661 = vadd.f32 %v624, 1.0
        %v662 = vlog2.pop %v661
        %v663 = vmul.f32 %v662, 0.6931472
        %v664 = vmul.f32 -0.5, %v624
        %v665 = vadd.f32 %v664, 1.0
        %v666 = vmul.f32 %v665, %v624
        %v667 = vand.u32 2147483647, %v624
        %vm668 = vcmp.lt.f32.partialorder %v667, 0.0004427343
        %v669 = vsel %vm668, %v666, %v663
        %v670 = vsub.f32 %v600, %v633
        %v671 = vsub.f32 %v601, %v642
        %v672 = vsub.f32 %v602, %v651
        %v673 = vsub.f32 %v603, %v660
        %v674 = vsub.f32 %v604, %v669
        %v675 = vsel %vm590, %v670, 0.0
        %v676 = vsel %vm591, %v671, 0.0
        %v677 = vsel %vm592, %v672, 0.0
        %v678 = vsel %vm593, %v673, 0.0
        %v679 = vsel %vm594, %v674, 0.0
        %vm680 = vcmask 7168
        %v681 = vsel %vm680, %v675, 0.0
        %v682 = vsel %vm680, %v676, 0.0
        %v683 = vadd.f32 %v681, %v682
        %v684 = vsel %vm680, %v677, 0.0
        %v685 = vadd.f32 %v683, %v684
        %v686 = vsel %vm680, %v678, 0.0
        %v687 = vadd.f32 %v685, %v686
        %v688 = vsel %vm680, %v679, 0.0
        %v689 = vadd.f32 %v687, %v688
        %690 = vadd.xlane.f32.xlu0 %v689
        %v691 = vpop.xlane.xlu0 %690
        %v692 = vrot.slane %v691, 4
        %v693 = vadd.f32 %v691, %v692
        %v694 = vrot.slane %v693, 2
        %v695 = vadd.f32 %v693, %v694
        %v696 = vrot.slane %v695, 1
        %v697 = vadd.f32 %v695, %v696
        %s698 = vtos %v697
        %s699 = smul.u32 %s20, 8
        %v700 = vstv %s699
        %v701 = vadd.s32 %v578, %v700
        %vm702 = vcmp.lt.s32.totalorder %v701, 16
        %v703 = vld [vmem:[%s277] sm:$0xff]
        %v704 = vmin.f32 %v703, 0.0
        %v705 = vand.u32 2147483647, %v703
        %v706 = vsub.f32 0.0, %v705
        %v707 = vmul.f32 %v706, 1.442695
        %v708 = vpow.pop %v707
        %v709 = vadd.f32 %v708, 1.0
        %v710 = vlog2.pop %v709
        %v711 = vmul.f32 %v710, 0.6931472
        %v712 = vmul.f32 -0.5, %v708
        %v713 = vadd.f32 %v712, 1.0
        %v714 = vmul.f32 %v713, %v708
        %v715 = vand.u32 2147483647, %v708
        %vm716 = vcmp.lt.f32.partialorder %v715, 0.0004427343
        %v717 = vsel %vm716, %v714, %v711
        %v718 = vsub.f32 %v704, %v717
        %v719 = vsel %vm702, %v718, 0.0
        %v720 = vsel %vm680, %v719, 0.0
        %721 = vadd.xlane.f32.xlu0 %v720
        %v722 = vpop.xlane.xlu0 %721
        %v723 = vrot.slane %v722, 4
        %v724 = vadd.f32 %v722, %v723
        %v725 = vrot.slane %v724, 2
        %v726 = vadd.f32 %v724, %v725
        %v727 = vrot.slane %v726, 1
        %v728 = vadd.f32 %v726, %v727
        %s729 = vtos %v728
        %vm730 = vcmp.eq.s32.totalorder %v279, 0
        %vm731 = vcmp.eq.s32.totalorder %v279, 1
        %v732 = vstv %s698
        %v733 = vsel %vm731, %v732, 0.0
        %v734 = vstv %s729
        %v735 = vsel %vm730, %v734, %v733
        %736 = vst [vmem:[%s261] sm:$0x1] %v735
        %s737 = sand.u32 %s148, 1
        %s738 = scalar_lea.sflag [#allocation4], %s737
        %s739 = sand.u32 %s148, 1
        %s740 = scalar_lea.vmem [#allocation5], %s739
        // Predicated region
        $region45: #{tpu_custom_call.1} parent=39 // pred_check
          %p741 = pneg %p158
        $region46: #{tpu_custom_call.1} parent=39 // pred_check_branch
          %743 = sbr.rel (%p741) target = $region48
        $region47: #{tpu_custom_call.1} parent=39 // pred_region
          %s745 = ssub.s32 16, 16
          %746 = vsyncadd %s738, %s745
          %s747 = smul.addr %s20, 16
          %s748 = scalar_lea.hbm %s5, %s747
          %s750 = sshll.u32 %s740, 4
          %s751 = int_to_ptr.vmem [resolvable:$true] %s750
          %753 = dma.vmem_to_hbm [thread:$0]  %s751, 16, %s748, %s738
        $region48: #{tpu_custom_call.1} parent=39 // pred_fallthru
          _
      $region40: #{tpu_custom_call.1} parent=5 // pred_fallthru
        _
      %p754 = scmp.le.s32.totalorder 2, %s15
      // Predicated region
      $region49: #{tpu_custom_call.1} parent=5 // pred_check
        %p755 = pneg %p754
      $region50: #{tpu_custom_call.1} parent=5 // pred_check_branch
        %757 = sbr.rel (%p755) target = $region52
      $region51: #{tpu_custom_call.1} parent=5 // pred_region
        %s758 = ssub.s32 %s15, 2
        // Predicated region
        $region53: #{tpu_custom_call.1} parent=51 // pred_check
          %p759 = pneg %p164
        $region54: #{tpu_custom_call.1} parent=51 // pred_check_branch
          %761 = sbr.rel (%p759) target = $region56
        $region55: #{tpu_custom_call.1} parent=51 // pred_region
          %s762 = sand.u32 %s149, 1
          %s763 = scalar_lea.sflag [#allocation4], %s762
          %s764 = sand.u32 %s149, 1
          %s765 = scalar_lea.vmem [#allocation5], %s764
          %766 = dma.done %s763, 16
        $region56: #{tpu_custom_call.1} parent=51 // pred_fallthru
          _
      $region52: #{tpu_custom_call.1} parent=5 // pred_fallthru
        _
    $region6: #{tpu_custom_call.1} parent=1 // loop_footer
      %s19 = sadd.s32 1, %s15
    $region7: #{tpu_custom_call.1} parent=1 // loop_footer_branch
      %14 = sbr.rel target = $region3
    $region8: #{tpu_custom_call.1} parent=1 // loop_exit
      _
    %767 = vsyncpa [#allocation3], 1
    %s768 = scalar_lea.sflag [#allocation3], 1
    %769 = vsyncpa %s768, 1
    %770 = vsyncpa [#allocation4], 1
    %s771 = scalar_lea.sflag [#allocation4], 1
    %772 = vsyncpa %s771, 1

</llo_original>
